<compile_context>
chip_gen: v5e
topology: v5e:2x2
jax: 0.10.0
libtpu: 0.0.40
codegen_flags: <defaults>
</compile_context>

<pallas_src>
import types

import jax
import jax.numpy as jnp
from jax.experimental import pallas as pl
from jax.experimental.pallas import tpu as pltpu


# --------------------------- VMEM budget / tiling --------------------------- #

def _vmem_limit_bytes():
    """Generation-aware scoped-VMEM target (v5e/v6e: 64 MiB, v7x: ~48 MiB)."""
    cap = 128 * 1024 * 1024
    try:
        info = pltpu.get_tpu_info()
        cap = int(getattr(info, "vmem_capacity_bytes", cap) or cap)
    except Exception:
        pass
    # ~75% of physical VMEM, capped at 64 MiB (plenty for a streaming
    # reduction; respects v7x's 64 MiB per-core VMEM).
    return min((cap * 3) // 4, 64 * 1024 * 1024)


def _tb_candidates(B, cap):
    """Batch tiles: multiples of 8 dividing B (sublane-dense output), or B."""
    cands = set()
    for d in range(8, min(B, cap) + 1, 8):
        if B % d == 0:
            cands.add(d)
    if B <= cap or not cands:
        cands.add(B)
    # Keep >= 2 steps along the leading ("parallel") batch axis when batch is
    # large enough, so both TensorCores get balanced work on v7x.
    if B >= 16:
        halved = {c for c in cands if c <= B // 2}
        if halved:
            cands = halved
    return sorted(cands, reverse=True)


def _ts_candidates(S):
    """Seq tiles: S itself, or divisors of S that are multiples of 128."""
    cands = {S}
    for d in range(128, S, 128):
        if S % d == 0:
            cands.add(d)
    return sorted(cands, reverse=True)


def _pick_tiles_avg(B, S, H, hid_isz, mask_isz, out_isz, n_hidden, vmem_limit):
    budget = (vmem_limit * 4) // 5          # headroom for compiler scratch
    tb_cands = _tb_candidates(B, cap=64)
    ts_cands = _ts_candidates(S)

    def vmem_bytes(tb, ts):
        hid = n_hidden * 2 * tb * ts * H * hid_isz   # double-buffered inputs
        mask = 2 * tb * ts * mask_isz                # double-buffered mask
        out = 2 * tb * H * out_isz
        scratch = tb * H * 4 + tb * 4
        return hid + mask + out + scratch

    for ts in ts_cands:            # biggest contiguous seq slab first
        for tb in tb_cands:
            if vmem_bytes(tb, ts) <= budget:
                return tb, ts
    # Nothing fits (e.g. huge awkward S): smallest aligned tiles, still legal.
    return tb_cands[-1], ts_cands[-1]


# ------------------------------- kernels ----------------------------------- #

def _cls_kernel(hid_ref, out_ref):
    # hid_ref: (TB, SCLS, H) -- only an 8-row (or full-S) slab is DMA'd per
    # batch row; row 0 is the CLS token.
    # TODO(synk): a size-1 seq block (pl.Squeezed) would DMA just the CLS row;
    # the 8-row slab keeps the block within the (8,128) sublane tiling rule.
    out_ref[...] = hid_ref[:, 0, :]


def _avg_direct_kernel(mask_ref, hid_ref, out_ref):
    # Whole sequence in one block: no scratch, no init/finalize.
    m = mask_ref[...]                                        # (TB, S)
    h = hid_ref[...]                                         # (TB, S, H)
    mq = m.astype(h.dtype)[:, None, :]                       # (TB, 1, S)
    num = jnp.einsum('bqs,bsh->bqh', mq, h,
                     preferred_element_type=jnp.float32)[:, 0, :]
    den = jnp.sum(m.astype(jnp.float32), axis=-1, keepdims=True)
    # TODO(synk): an all-zero mask row yields NaN/Inf, same as the reference.
    out_ref[...] = (num / den).astype(out_ref.dtype)


def _avg_kernel(mask_ref, hid_ref, out_ref, acc_ref, den_ref):
    # Multi-step reduction over the seq axis with f32 accumulators.
    ks = pl.program_id(1)

    @pl.when(ks == 0)
    def _():
        acc_ref[...] = jnp.zeros_like(acc_ref)
        den_ref[...] = jnp.zeros_like(den_ref)

    m = mask_ref[...]
    h = hid_ref[...]
    mq = m.astype(h.dtype)[:, None, :]
    acc_ref[...] += jnp.einsum('bqs,bsh->bqh', mq, h,
                               preferred_element_type=jnp.float32)[:, 0, :]
    den_ref[...] += jnp.sum(m.astype(jnp.float32), axis=-1, keepdims=True)

    @pl.when(ks == pl.num_programs(1) - 1)
    def _():
        out_ref[...] = (acc_ref[...] / den_ref[...]).astype(out_ref.dtype)


def _avg2_direct_kernel(mask_ref, hid_a_ref, hid_b_ref, out_ref):
    m = mask_ref[...]
    a = hid_a_ref[...]
    b = hid_b_ref[...]
    mq = m.astype(a.dtype)[:, None, :]
    sa = jnp.einsum('bqs,bsh->bqh', mq, a, preferred_element_type=jnp.float32)
    sb = jnp.einsum('bqs,bsh->bqh', mq, b, preferred_element_type=jnp.float32)
    # mean of (a+b)/2: the 0.5 is folded into the denominator.
    den = 2.0 * jnp.sum(m.astype(jnp.float32), axis=-1, keepdims=True)
    out_ref[...] = ((sa + sb)[:, 0, :] / den).astype(out_ref.dtype)


def _avg2_kernel(mask_ref, hid_a_ref, hid_b_ref, out_ref, acc_ref, den_ref):
    ks = pl.program_id(1)

    @pl.when(ks == 0)
    def _():
        acc_ref[...] = jnp.zeros_like(acc_ref)
        den_ref[...] = jnp.zeros_like(den_ref)

    m = mask_ref[...]
    a = hid_a_ref[...]
    b = hid_b_ref[...]
    mq = m.astype(a.dtype)[:, None, :]
    sa = jnp.einsum('bqs,bsh->bqh', mq, a, preferred_element_type=jnp.float32)
    sb = jnp.einsum('bqs,bsh->bqh', mq, b, preferred_element_type=jnp.float32)
    acc_ref[...] += (sa + sb)[:, 0, :]
    den_ref[...] += jnp.sum(m.astype(jnp.float32), axis=-1, keepdims=True)

    @pl.when(ks == pl.num_programs(1) - 1)
    def _():
        out_ref[...] = (acc_ref[...] / (2.0 * den_ref[...])).astype(out_ref.dtype)


# ------------------------------- wrappers ----------------------------------- #

def _cls_pool(last_hidden):
    B, S, H = last_hidden.shape
    tb = _tb_candidates(B, cap=256)[0]
    scls = 8 if S >= 8 else S    # 8-row slab keeps sublane tiling legal
    return pl.pallas_call(
        _cls_kernel,
        out_shape=jax.ShapeDtypeStruct((B, H), last_hidden.dtype),
        grid_spec=pltpu.PrefetchScalarGridSpec(
            num_scalar_prefetch=0,
            grid=(B // tb,),
            in_specs=[pl.BlockSpec((tb, scls, H), lambda b: (b, 0, 0))],
            out_specs=pl.BlockSpec((tb, H), lambda b: (b, 0)),
        ),
        compiler_params=pltpu.CompilerParams(
            dimension_semantics=("parallel",)),
    )(last_hidden)


def _masked_avg_pool(attention_mask, hiddens):
    # TODO(synk): assumes a numeric 0/1 mask (additive -inf masks would be
    # silently wrong), same as the PyTorch reference.
    n_hidden = len(hiddens)
    B, S, H = hiddens[0].shape
    dt = hiddens[0].dtype
    vmem_limit = _vmem_limit_bytes()
    tb, ts = _pick_tiles_avg(B, S, H, dt.itemsize,
                             attention_mask.dtype.itemsize, dt.itemsize,
                             n_hidden, vmem_limit)
    n_k = S // ts

    cparams = pltpu.CompilerParams(
        dimension_semantics=("parallel",) if n_k == 1
        else ("parallel", "arbitrary"),
        vmem_limit_bytes=int(vmem_limit))

    if n_k == 1:
        kernel = _avg_direct_kernel if n_hidden == 1 else _avg2_direct_kernel
        grid_spec = pltpu.PrefetchScalarGridSpec(
            num_scalar_prefetch=0,
            grid=(B // tb,),
            in_specs=[pl.BlockSpec((tb, S), lambda b: (b, 0))]
                     + [pl.BlockSpec((tb, S, H), lambda b: (b, 0, 0))] * n_hidden,
            out_specs=pl.BlockSpec((tb, H), lambda b: (b, 0)),
        )
    else:
        kernel = _avg_kernel if n_hidden == 1 else _avg2_kernel
        grid_spec = pltpu.PrefetchScalarGridSpec(
            num_scalar_prefetch=0,
            grid=(B // tb, n_k),
            in_specs=[pl.BlockSpec((tb, ts), lambda b, k: (b, k))]
                     + [pl.BlockSpec((tb, ts, H), lambda b, k: (b, k, 0))] * n_hidden,
            out_specs=pl.BlockSpec((tb, H), lambda b, k: (b, 0)),
            scratch_shapes=[pltpu.VMEM((tb, H), jnp.float32),
                            pltpu.VMEM((tb, 1), jnp.float32)],
        )

    return pl.pallas_call(
        kernel,
        out_shape=jax.ShapeDtypeStruct((B, H), dt),
        grid_spec=grid_spec,
        compiler_params=cparams,
    )(attention_mask, *hiddens)


class Pooler:
    """Pallas-backed equivalent of the SimCSE Pooler module (parameter-free)."""

    def __init__(self, pooler_type):
        assert pooler_type in ['cls', 'cls_before_pooler', 'avg',
                               'avg_top2', 'avg_first_last'], \
            'unrecognized pooling type %s' % pooler_type
        self.pooler_type = pooler_type

    def __call__(self, attention_mask, outputs):
        last_hidden = outputs.last_hidden_state
        hidden_states = outputs.hidden_states
        if self.pooler_type in ['cls_before_pooler', 'cls']:
            return _cls_pool(last_hidden)
        elif self.pooler_type == 'avg':
            return _masked_avg_pool(attention_mask, [last_hidden])
        elif self.pooler_type == 'avg_first_last':
            return _masked_avg_pool(attention_mask,
                                    [hidden_states[1], hidden_states[-1]])
        elif self.pooler_type == 'avg_top2':
            return _masked_avg_pool(attention_mask,
                                    [hidden_states[-2], hidden_states[-1]])
        else:
            raise NotImplementedError


# ------------------------------- reference ---------------------------------- #

def _ref_pooler(pooler_type, attention_mask, outputs):
    last_hidden = outputs.last_hidden_state
    hidden_states = outputs.hidden_states
    mask = attention_mask.astype(jnp.float32)
    if pooler_type in ['cls_before_pooler', 'cls']:
        return last_hidden[:, 0]
    if pooler_type == 'avg':
        return ((last_hidden * mask[..., None]).sum(1)
                / mask.sum(-1)[..., None])
    if pooler_type == 'avg_first_last':
        h = (hidden_states[1] + hidden_states[-1]) / 2.0
        return (h * mask[..., None]).sum(1) / mask.sum(-1)[..., None]
    if pooler_type == 'avg_top2':
        h = (hidden_states[-1] + hidden_states[-2]) / 2.0
        return (h * mask[..., None]).sum(1) / mask.sum(-1)[..., None]
    raise NotImplementedError


# --------------------------------- main ------------------------------------- #

if __name__ == "__main__":
    key = jax.random.PRNGKey(0)
    B, S, H = 2, 8, 32
    n_layers = 4  # hidden_states has n_layers + 1 entries (incl. embeddings)

    keys = jax.random.split(key, n_layers + 3)
    hidden_states = tuple(
        jax.random.normal(keys[i], (B, S, H), dtype=jnp.float32)
        for i in range(n_layers + 1)
    )
    last_hidden_state = hidden_states[-1]
    pooler_output = jax.random.normal(keys[-2], (B, H), dtype=jnp.float32)

    # attention_mask: first sentence length 8, second length 5 (rest padded)
    lengths = jnp.array([8, 5], dtype=jnp.int32)
    attention_mask = (jnp.arange(S)[None, :] < lengths[:, None]).astype(jnp.float32)

    outputs = types.SimpleNamespace(
        last_hidden_state=last_hidden_state,
        pooler_output=pooler_output,
        hidden_states=hidden_states,
    )

    all_ok = True
    for ptype in ['cls', 'cls_before_pooler', 'avg', 'avg_top2', 'avg_first_last']:
        pooler = Pooler(ptype)
        out = jax.block_until_ready(pooler(attention_mask, outputs))
        ref = _ref_pooler(ptype, attention_mask, outputs)
        if not jnp.allclose(out, ref, atol=1e-5, rtol=1e-5):
            all_ok = False
            print(f"MISMATCH for pooler_type={ptype}")

    if all_ok:
        print("KERNEL_OK")
</pallas_src>

<mosaic_0001>
module attributes {stable_mosaic.version = 11 : i64} {
  func.func @_cls_kernel(%arg0: i32, %arg1: memref<2x8x32xf32, #tpu.memory_space<vmem>>, %arg2: memref<2x32xf32, #tpu.memory_space<vmem>>) attributes {dimension_semantics = [#tpu.dimension_semantics<parallel>], iteration_bounds = array<i64: 1>, scalar_prefetch = 0 : i64, scratch_operands = 0 : i64, tpu.core_type = #tpu.core_type<tc>, window_params = [{transform_indices = @transform_0, window_bounds = array<i64: 2, 8, 32>}, {transform_indices = @transform_1, window_bounds = array<i64: 2, 32>}]} {
    %c0 = arith.constant 0 : index
    %c0_0 = arith.constant 0 : index
    %c0_1 = arith.constant 0 : index
    %0 = vector.load %arg1[%c0, %c0_0, %c0_1] : memref<2x8x32xf32, #tpu.memory_space<vmem>>, vector<2x1x32xf32>
    %1 = vector.shape_cast %0 : vector<2x1x32xf32> to vector<2x32xf32>
    %c0_2 = arith.constant 0 : index
    %c0_3 = arith.constant 0 : index
    %2 = vector.load %arg2[%c0_2, %c0_3] : memref<2x32xf32, #tpu.memory_space<vmem>>, vector<2x32xf32>
    tpu.vector_store %arg2[%c0_2, %c0_3], %1 {strides = array<i32>} : memref<2x32xf32, #tpu.memory_space<vmem>>, vector<2x32xf32>,
    return
  }
  func.func @transform_0(%arg0: i32) -> (i32, i32, i32) {
    %c0_i32 = arith.constant 0 : i32
    %c0_i32_0 = arith.constant 0 : i32
    %c0_i32_1 = arith.constant 0 : i32
    return %arg0, %c0_i32, %c0_i32_0 : i32, i32, i32
  }
  func.func @transform_1(%arg0: i32) -> (i32, i32) {
    %c0_i32 = arith.constant 0 : i32
    %c0_i32_0 = arith.constant 0 : i32
    return %arg0, %c0_i32 : i32, i32
  }
}

</mosaic_0001>

<llo_original>
// kernel: tpu_custom_call.1
$region0: #{tpu_custom_call.1}
  #allocation0 [shape = 'u32[]', space=smem, size = 0x4, offset = 0x4, fixed_abs, tag = 'smem constant byte address 0x4 - core index']
  #allocation1 [shape = 'u32[72,128]{1,0:T(1,128)}', space=vmem, size = 0x9000, scoped, tag = 'internal scratch']
  %s0 = inlined_call_operand.hbm [shape: f32[2,8,32], index: 0, kind: input, shape index: {}]
  %s1 = inlined_call_operand.hbm [shape: f32[2,32], index: 1, kind: output, shape index: {}]
  %s2 = sld [smem:[#allocation0]]
  $region18: #{tpu_custom_call.1} parent=0
    _
  %s4 = ssub.s32 1, %s2
  %s5 = scalar_select 0, %s4, %s2
  $region1: #{tpu_custom_call.1} parent=0
    #allocation2 [shape = 'u8[8192]{0}', space=vmem, size = 0x2000, scoped, tag = 'input window, operand 0, single buffered']
    #allocation3 [shape = 's32[1]{0}', space=sflag, size = 0x4, scoped, tag = 'scoped memory for tpu_custom_call.1']
    #allocation4 [shape = 's32[1]{0}', space=sflag, size = 0x4, scoped, tag = 'scoped memory for tpu_custom_call.1']
    #allocation5 [shape = 'u8[1024]{0}', space=vmem, size = 0x400, scoped, tag = 'output window, operand 0, single buffered']
    %6 = vsyncpa [#allocation3], 0
    %7 = vsyncpa [#allocation4], 0
    // Predicated region
    $region2: #{tpu_custom_call.1} parent=1 // pred_check
      _
    $region3: #{tpu_custom_call.1} parent=1 // pred_check_branch
      %9 = sbr.rel (0) target = $region5
    $region4: #{tpu_custom_call.1} parent=1 // pred_region
      %11 = vsyncadd [#allocation3], 0
      %s12 = sshll.u32 %s0, 4
      %s13 = int_to_ptr.hbm [resolvable:$true] %s12
      %s14 = sshll.u32 [#allocation2], 4
      %s15 = int_to_ptr.vmem [resolvable:$true] %s14
      %20 = dma.hbm_to_vmem [thread:$0]  %s13, 256, %s15, [#allocation3], 128, 128, 8
    $region5: #{tpu_custom_call.1} parent=1 // pred_fallthru
      _
    // Predicated region
    $region6: #{tpu_custom_call.1} parent=1 // pred_check
      _
    $region7: #{tpu_custom_call.1} parent=1 // pred_check_branch
      %22 = sbr.rel (0) target = $region9
    $region8: #{tpu_custom_call.1} parent=1 // pred_region
      %24 = dma.done [#allocation3], 256
    $region9: #{tpu_custom_call.1} parent=1 // pred_fallthru
      _
    %v25 = vld [vmem:[#allocation2] sm:$0x1]
    %v26 = vld [vmem:[#allocation2 + $0x8] sm:$0x1]
    %v29 = vrot.slane %v26, 7
    %vm30 = vcmask 1041409
    %v31 = vsel %vm30, %v29, %v25
    %vm33 = vcmask 254976
    %34 = vst.msk [vmem:[#allocation5] sm:$0x3] %vm33, %v31
    // Predicated region
    $region10: #{tpu_custom_call.1} parent=1 // pred_check
      _
    $region11: #{tpu_custom_call.1} parent=1 // pred_check_branch
      %36 = sbr.rel (0) target = $region13
    $region12: #{tpu_custom_call.1} parent=1 // pred_region
      %38 = vsyncadd [#allocation4], 0
      %s40 = sshll.u32 [#allocation5], 4
      %s41 = int_to_ptr.vmem [resolvable:$true] %s40
      %s42 = sshll.u32 %s1, 4
      %s43 = int_to_ptr.hbm [resolvable:$true] %s42
      %45 = dma.vmem_to_hbm [thread:$0]  %s41, 32, %s43, [#allocation4]
    $region13: #{tpu_custom_call.1} parent=1 // pred_fallthru
      _
    // Predicated region
    $region14: #{tpu_custom_call.1} parent=1 // pred_check
      _
    $region15: #{tpu_custom_call.1} parent=1 // pred_check_branch
      %47 = sbr.rel (0) target = $region17
    $region16: #{tpu_custom_call.1} parent=1 // pred_region
      %49 = dma.done [#allocation4], 32
    $region17: #{tpu_custom_call.1} parent=1 // pred_fallthru
      _
    %50 = vsyncpa [#allocation3], 1
    %51 = vsyncpa [#allocation4], 1

</llo_original>
